<compile_context>
chip_gen: v6e
topology: v6e:2x2x1
jax: 0.10.0
libtpu: 0.0.40
codegen_flags: <defaults>
</compile_context>

<pallas_src>
import math

import jax
import jax.numpy as jnp
from jax.experimental import pallas as pl
from jax.experimental.pallas import tpu as pltpu


def _measure_kernel(x_ref, o_ref):
    # x_ref: (K, TN) block -- reduced axis K on sublanes, rows on lanes.
    x = x_ref[...].astype(jnp.float32)
    # Numerically-stable log(softplus(x)):
    #   softplus(x) = logaddexp(x, 0); for very negative x use the asymptote
    #   log(softplus(x)) -> x (avoids log(0) = -inf after f32 underflow).
    sp = jnp.logaddexp(x, 0.0)
    lsp = jnp.where(x < -15.0, x, jnp.log(sp))
    # Sublane reduction over K -> lane-dense (1, TN) row of per-row sums.
    o_ref[...] = jnp.sum(lsp, axis=0, keepdims=True)


def measure_forward(x, dim, temperature=0.2, tile_n=2048):
    """Equivalent of Measure(dim, temperature).forward(x)."""
    del temperature  # forward() does not use temperature
    orig_dtype = x.dtype
    lead_shape = x.shape[:-1]
    H = x.shape[-1]
    K = H - dim
    M = math.prod(lead_shape) if lead_shape else 1

    if K <= 0:
        # Sum over an empty reduction axis is 0.
        return jnp.zeros(lead_shape, dtype=orig_dtype)

    # Present the operand as (K, M): rows on the 128-lane axis, reduced K axis
    # on sublanes.  Under jit this slice+transpose fuses into a single HBM
    # pass in the original dtype (no wrapper f32 cast, no pad concatenate).
    xt = x.reshape(M, H)[:, dim:].T  # (K, M)

    # Tile the lane (row) axis.  Keep the double-buffered input block well
    # under the scoped VMEM limit on all generations (v7x: ~32 MiB scoped,
    # 64 MiB physical).
    itemsize = jnp.dtype(orig_dtype).itemsize
    per_buffer_budget = 8 * 1024 * 1024
    max_tn = max(128, (per_buffer_budget // (K * itemsize)) // 128 * 128)
    tn = min(tile_n, max_tn)
    if M <= tn:
        block_n = M          # single block covering the full array (legal for any M)
        grid = (1,)
    else:
        block_n = tn         # multiple of 128; partial boundary block is masked
        grid = (pl.cdiv(M, tn),)

    out = pl.pallas_call(
        _measure_kernel,
        out_shape=jax.ShapeDtypeStruct((1, M), jnp.float32),
        grid=grid,
        in_specs=[pl.BlockSpec((K, block_n), lambda i: (0, i))],
        out_specs=pl.BlockSpec((1, block_n), lambda i: (0, i)),
        compiler_params=pltpu.CompilerParams(
            dimension_semantics=("parallel",),
        ),
    )(xt)

    return out[0].reshape(lead_shape).astype(orig_dtype)


if __name__ == "__main__":
    key = jax.random.PRNGKey(0)
    # Small shapes consistent with the module: batch=2, seq=8, hidden=32.
    B, S, H = 2, 8, 32
    dim = 16  # Measure(dim=16) -> measures the last 16 features
    x = jax.random.normal(key, (B, S, H), dtype=jnp.float32)

    out = measure_forward(x, dim)
    out = jax.block_until_ready(out)

    ref = jnp.sum(
        jnp.log(jax.nn.softplus(x[..., dim:].astype(jnp.float32))), axis=-1
    )
    assert out.shape == (B, S), out.shape
    assert jnp.allclose(out, ref, atol=1e-5, rtol=1e-5), float(
        jnp.max(jnp.abs(out - ref))
    )
    print("KERNEL_OK")
</pallas_src>

<mosaic_0001>
module attributes {stable_mosaic.version = 11 : i64} {
  func.func @_measure_kernel(%arg0: i32, %arg1: memref<16x16xf32, #tpu.memory_space<vmem>>, %arg2: memref<1x16xf32, #tpu.memory_space<vmem>>) attributes {dimension_semantics = [#tpu.dimension_semantics<parallel>], iteration_bounds = array<i64: 1>, scalar_prefetch = 0 : i64, scratch_operands = 0 : i64, tpu.core_type = #tpu.core_type<tc>, window_params = [{transform_indices = @transform_0, window_bounds = array<i64: 16, 16>}, {transform_indices = @transform_1, window_bounds = array<i64: 1, 16>}]} {
    %c0 = arith.constant 0 : index
    %c0_0 = arith.constant 0 : index
    %0 = vector.load %arg1[%c0, %c0_0] : memref<16x16xf32, #tpu.memory_space<vmem>>, vector<16x16xf32>
    %cst = arith.constant 0.000000e+00 : f32
    %1 = vector.broadcast %cst : f32 to vector<16x16xf32>
    %2 = arith.maximumf %0, %1 : vector<16x16xf32>
    %3 = vector.broadcast %cst : f32 to vector<16x16xf32>
    %4 = arith.subf %0, %3 : vector<16x16xf32>
    %5 = arith.cmpf one, %4, %4 : vector<16x16xf32>
    %6 = vector.broadcast %cst : f32 to vector<16x16xf32>
    %7 = arith.addf %0, %6 : vector<16x16xf32>
    %8 = math.absf %4 : vector<16x16xf32>
    %cst_1 = arith.constant 0.000000e+00 : f32
    %9 = vector.broadcast %cst_1 : f32 to vector<16x16xf32>
    %10 = arith.subf %9, %8 : vector<16x16xf32>
    %11 = math.exp %10 : vector<16x16xf32>
    %12 = math.log1p %11 : vector<16x16xf32>
    %13 = arith.addf %2, %12 : vector<16x16xf32>
    %14 = arith.select %5, %7, %13 : vector<16x16xi1>, vector<16x16xf32>
    %cst_2 = arith.constant -1.500000e+01 : f32
    %15 = vector.broadcast %cst_2 : f32 to vector<16x16xf32>
    %16 = arith.cmpf olt, %0, %15 : vector<16x16xf32>
    %17 = math.log %14 : vector<16x16xf32>
    %18 = arith.select %16, %0, %17 : vector<16x16xi1>, vector<16x16xf32>
    %cst_3 = arith.constant dense<0.000000e+00> : vector<16xf32>
    %19 = vector.multi_reduction <add>, %18, %cst_3 [0] : vector<16x16xf32> to vector<16xf32>
    %20 = vector.shape_cast %19 : vector<16xf32> to vector<1x16xf32>
    %c0_4 = arith.constant 0 : index
    %c0_5 = arith.constant 0 : index
    %21 = vector.load %arg2[%c0_4, %c0_5] : memref<1x16xf32, #tpu.memory_space<vmem>>, vector<1x16xf32>
    tpu.vector_store %arg2[%c0_4, %c0_5], %20 {strides = array<i32>} : memref<1x16xf32, #tpu.memory_space<vmem>>, vector<1x16xf32>,
    return
  }
  func.func @transform_0(%arg0: i32) -> (i32, i32) {
    %c0_i32 = arith.constant 0 : i32
    %c0_i32_0 = arith.constant 0 : i32
    return %c0_i32, %arg0 : i32, i32
  }
  func.func @transform_1(%arg0: i32) -> (i32, i32) {
    %c0_i32 = arith.constant 0 : i32
    %c0_i32_0 = arith.constant 0 : i32
    return %c0_i32, %arg0 : i32, i32
  }
}

</mosaic_0001>

<llo_original>
// kernel: tpu_custom_call.1
$region0: #{tpu_custom_call.1}
  #allocation0 [shape = 'u32[]', space=smem, size = 0x4, offset = 0x4, fixed_abs, tag = 'smem constant byte address 0x4 - core index']
  #allocation1 [shape = 'u32[144,128]{1,0:T(1,128)}', space=vmem, size = 0x12000, scoped, tag = 'internal scratch']
  %s0 = inlined_call_operand.hbm [shape: f32[16,16], index: 0, kind: input, shape index: {}]
  %s1 = inlined_call_operand.hbm [shape: f32[1,16], index: 1, kind: output, shape index: {}]
  %s2 = sld [smem:[#allocation0]]
  $region18: #{tpu_custom_call.1} parent=0
    _
  %s4 = ssub.s32 1, %s2
  %s5 = scalar_select 0, %s4, %s2
  $region1: #{tpu_custom_call.1} parent=0
    #allocation2 [shape = 'u8[8192]{0}', space=vmem, size = 0x2000, scoped, tag = 'input window, operand 0, single buffered']
    #allocation3 [shape = 's32[1]{0}', space=sflag, size = 0x4, scoped, tag = 'scoped memory for tpu_custom_call.1']
    #allocation4 [shape = 's32[1]{0}', space=sflag, size = 0x4, scoped, tag = 'scoped memory for tpu_custom_call.1']
    #allocation5 [shape = 'u8[512]{0}', space=vmem, size = 0x400, scoped, tag = 'output window, operand 0, single buffered']
    %6 = vsyncpa [#allocation3], 0
    %7 = vsyncpa [#allocation4], 0
    // Predicated region
    $region2: #{tpu_custom_call.1} parent=1 // pred_check
      _
    $region3: #{tpu_custom_call.1} parent=1 // pred_check_branch
      %9 = sbr.rel (0) target = $region5
    $region4: #{tpu_custom_call.1} parent=1 // pred_region
      %s11 = ssub.s32 256, 256
      %12 = vsyncadd [#allocation3], %s11
      %s13 = sshll.u32 [#allocation2], 4
      %s14 = int_to_ptr.vmem [resolvable:$true] %s13
      %19 = dma.hbm_to_vmem [thread:$0]  %s0, 256, %s14, [#allocation3], 128, 128, 8
    $region5: #{tpu_custom_call.1} parent=1 // pred_fallthru
      _
    // Predicated region
    $region6: #{tpu_custom_call.1} parent=1 // pred_check
      _
    $region7: #{tpu_custom_call.1} parent=1 // pred_check_branch
      %21 = sbr.rel (0) target = $region9
    $region8: #{tpu_custom_call.1} parent=1 // pred_region
      %22 = dma.done [#allocation3], 256
    $region9: #{tpu_custom_call.1} parent=1 // pred_fallthru
      _
    %v23 = vld [vmem:[#allocation2] sm:$0xff]
    %v24 = vld [vmem:[#allocation2 + $0x8] sm:$0xff]
    %v25 = vmax.f32 %v23, 0.0
    %v26 = vmax.f32 %v24, 0.0
    %vm27 = vcmp.ne.f32.partialorder %v23, %v23
    %vm28 = vcmp.ne.f32.partialorder %v24, %v24
    %v29 = vadd.f32 %v23, 0.0
    %v30 = vadd.f32 %v24, 0.0
    %v31 = vand.u32 2147483647, %v23
    %v32 = vand.u32 2147483647, %v24
    %v33 = vsub.f32 0.0, %v31
    %v34 = vsub.f32 0.0, %v32
    %v35 = vmul.f32 %v33, 1.442695
    %v36 = vpow.pop %v35
    %v37 = vmul.f32 %v34, 1.442695
    %v38 = vpow.pop %v37
    %v39 = vadd.f32 %v36, 1.0
    %v40 = vlog2.pop %v39
    %v41 = vmul.f32 %v40, 0.6931472
    %v42 = vmul.f32 -0.5, %v36
    %v43 = vadd.f32 %v42, 1.0
    %v44 = vmul.f32 %v43, %v36
    %v45 = vand.u32 2147483647, %v36
    %vm46 = vcmp.lt.f32.partialorder %v45, 0.0004427343
    %v47 = vsel %vm46, %v44, %v41
    %v48 = vadd.f32 %v38, 1.0
    %v49 = vlog2.pop %v48
    %v50 = vmul.f32 %v49, 0.6931472
    %v51 = vmul.f32 -0.5, %v38
    %v52 = vadd.f32 %v51, 1.0
    %v53 = vmul.f32 %v52, %v38
    %v54 = vand.u32 2147483647, %v38
    %vm55 = vcmp.lt.f32.partialorder %v54, 0.0004427343
    %v56 = vsel %vm55, %v53, %v50
    %v57 = vadd.f32 %v25, %v47
    %v58 = vadd.f32 %v26, %v56
    %v59 = vsel %vm27, %v29, %v57
    %v60 = vsel %vm28, %v30, %v58
    %vm61 = vcmp.lt.f32.partialorder %v23, -15.0
    %vm62 = vcmp.lt.f32.partialorder %v24, -15.0
    %v63 = vlog2.pop %v59
    %v64 = vmul.f32 %v63, 0.6931472
    %v65 = vlog2.pop %v60
    %v66 = vmul.f32 %v65, 0.6931472
    %v67 = vsel %vm61, %v23, %v64
    %v68 = vsel %vm62, %v24, %v66
    %vm69 = vcmask 130048
    %v70 = vsel %vm69, %v67, 0.0
    %v71 = vsel %vm69, %v68, 0.0
    %v72 = vadd.f32 %v70, %v71
    %v73 = vrot.slane %v72, 4
    %v74 = vadd.f32 %v72, %v73
    %v75 = vrot.slane %v74, 2
    %v76 = vadd.f32 %v74, %v75
    %v77 = vrot.slane %v76, 1
    %v78 = vadd.f32 %v76, %v77
    %vm79 = vcmask 122880
    %80 = vst.msk [vmem:[#allocation5] sm:$0x1] %vm79, %v78
    // Predicated region
    $region10: #{tpu_custom_call.1} parent=1 // pred_check
      _
    $region11: #{tpu_custom_call.1} parent=1 // pred_check_branch
      %82 = sbr.rel (0) target = $region13
    $region12: #{tpu_custom_call.1} parent=1 // pred_region
      %s84 = ssub.s32 16, 16
      %85 = vsyncadd [#allocation4], %s84
      %s87 = sshll.u32 [#allocation5], 4
      %s88 = int_to_ptr.vmem [resolvable:$true] %s87
      %90 = dma.vmem_to_hbm [thread:$0]  %s88, 16, %s1, [#allocation4]
    $region13: #{tpu_custom_call.1} parent=1 // pred_fallthru
      _
    // Predicated region
    $region14: #{tpu_custom_call.1} parent=1 // pred_check
      _
    $region15: #{tpu_custom_call.1} parent=1 // pred_check_branch
      %92 = sbr.rel (0) target = $region17
    $region16: #{tpu_custom_call.1} parent=1 // pred_region
      %93 = dma.done [#allocation4], 16
    $region17: #{tpu_custom_call.1} parent=1 // pred_fallthru
      _
    %94 = vsyncpa [#allocation3], 1
    %95 = vsyncpa [#allocation4], 1

</llo_original>
